<compile_context>
chip_gen: v7x
topology: tpu7x:2x2x1
jax: 0.10.0
libtpu: 0.0.40
codegen_flags: <defaults>
</compile_context>

<pallas_src>
import functools
import math

import jax
import jax.numpy as jnp
from jax.experimental import pallas as pl
from jax.experimental.pallas import tpu as pltpu

_LANE = 128
_SUBLANE = 8
_TILE_TARGET_BYTES = 4 << 20      # ~4 MiB per operand buffer (Pallas double-buffers)
_SMALL_PROBLEM_BYTES = 2 << 20    # below this, minimize grid steps (fixed per-step cost dominates)
_PE_RESIDENT_MAX_BYTES = 8 << 20  # cap for keeping the whole PE table resident in VMEM
_VMEM_LIMIT_BYTES = 32 << 20      # explicit: above v5e's 16 MiB scoped default, under v7x physical


def make_position_encoding_table(d_model: int = 256, max_len: int = 1024) -> jnp.ndarray:
    """Deterministic sinusoidal PE table, identical to the PyTorch __init__."""
    position = jnp.arange(0, max_len, dtype=jnp.float32)[:, None]               # (max_len, 1)
    div_term = jnp.exp(
        -jnp.arange(0, d_model, 2, dtype=jnp.float32) * (math.log(10000.0) / d_model)
    )                                                                            # (d_model//2,)
    angles = position * div_term                                                 # (max_len, d/2)
    pe = jnp.zeros((max_len, d_model), dtype=jnp.float32)
    pe = pe.at[:, 0::2].set(jnp.sin(angles))
    pe = pe.at[:, 1::2].set(jnp.cos(angles))
    return pe


def _add_pe_rowtile_kernel(x_ref, pe_ref, o_ref):
    # x_ref / pe_ref / o_ref: (tr, lanes) tiles (batch dim squeezed away).
    o_ref[...] = (x_ref[...] + pe_ref[...]).astype(o_ref.dtype)


def _add_pe_batched_kernel(x_ref, pe_ref, o_ref, *, rows):
    # x_ref / o_ref: (TB, rows, lanes); pe_ref: (>=rows, lanes) (possibly the full table).
    pe = pe_ref[0:rows, :]                       # static slice; no-op when pe_ref has `rows` rows
    o_ref[...] = (x_ref[...] + pe[None, :, :]).astype(o_ref.dtype)


def position_encoding_forward(word_embeddings: jnp.ndarray,
                              pe: jnp.ndarray,
                              pe_lane: jnp.ndarray | None = None,
                              *,
                              donate_input: bool = False) -> jnp.ndarray:
    """Equivalent of PositionEncoding.forward (2-D or 3-D embeddings)."""
    if word_embeddings.ndim == 2:
        out = position_encoding_forward(word_embeddings[None, ...], pe, pe_lane,
                                        donate_input=donate_input)
        return out[0]
    if word_embeddings.ndim != 3:
        raise ValueError(f"Unsupported embedding tensor shape: {word_embeddings.shape}")

    b, seq_len, d = word_embeddings.shape
    max_len, d_model = pe.shape
    if seq_len > max_len:
        raise ValueError(f"seq_len={seq_len} exceeds PE table max_len={max_len}")
    if d > d_model:
        raise ValueError(f"embedding dim d={d} exceeds PE table d_model={d_model}")

    # Match torch type promotion (e.g. bf16 embeddings + f32 PE buffer -> f32 output).
    out_dtype = jnp.promote_types(word_embeddings.dtype, pe.dtype)

    # ---- pick a lane-dense (rows, lanes) view ---------------------------------------
    if d % _LANE == 0:
        rows, lanes = seq_len, d
        xr = word_embeddings
        pe_t = pe if d == d_model else pe[:, :d]     # rare: build the table with matching d_model
    elif d == d_model and (seq_len * d) % _LANE == 0 and pe_lane is not None:
        # Fold (S, D) -> (S*D/128, 128): unmasked full-width stores; reshape is contiguous (free).
        rows, lanes = (seq_len * d) // _LANE, _LANE
        xr = word_embeddings.reshape(b, rows, lanes)
        pe_t = pe_lane                               # pre-folded once at setup, no per-call pass
    else:
        # TODO(synk): pad d up to a 128 multiple for lane-dense stores; this fallback uses
        # masked partial stores (correct, slower).
        rows, lanes = seq_len, d
        xr = word_embeddings
        pe_t = pe if d == d_model else pe[:, :d]

    pe_rows_total = pe_t.shape[0]
    elem_bytes = max(word_embeddings.dtype.itemsize, jnp.dtype(out_dtype).itemsize)
    row_bytes = lanes * elem_bytes
    total_bytes = b * rows * row_bytes
    rows_per_tile = max(1, _TILE_TARGET_BYTES // row_bytes)

    use_batched = (rows <= rows_per_tile) or (rows < _SUBLANE)
    if (use_batched and total_bytes >= _SMALL_PROBLEM_BYTES and b < 4
            and rows >= 4 * _SUBLANE):
        # Mid-sized input that would collapse to <4 grid steps (no double-buffering work,
        # no megacore split on v7x): tile the row axis instead.
        use_batched = False

    if use_batched:
        # Short sequences: fold batch elements into the block -> fewer, larger DMAs.
        per_batch_bytes = max(1, rows * row_bytes)
        tb = max(1, min(b, _TILE_TARGET_BYTES // per_batch_bytes))
        if total_bytes >= _SMALL_PROBLEM_BYTES and b >= 4:
            tb = min(tb, max(1, b // 4))             # keep >=4 steps for pipelining / megacore
        grid = (pl.cdiv(b, tb),)

        if rows % _SUBLANE == 0 or rows == pe_rows_total:
            pe_arg, pe_block_rows = pe_t, rows
        elif pe_rows_total * lanes * pe_t.dtype.itemsize <= _PE_RESIDENT_MAX_BYTES:
            # Keep the whole table resident (constant block index -> DMA'd once) and slice
            # the needed rows in-kernel; avoids any per-call XLA slice pass.
            pe_arg, pe_block_rows = pe_t, pe_rows_total
        else:
            pe_arg, pe_block_rows = pe_t[:rows], rows  # rare: huge table + awkward row count

        kernel = functools.partial(_add_pe_batched_kernel, rows=rows)
        in_specs = [
            pl.BlockSpec((tb, rows, lanes), lambda i: (i, 0, 0)),
            pl.BlockSpec((pe_block_rows, lanes), lambda i: (0, 0)),
        ]
        out_spec = pl.BlockSpec((tb, rows, lanes), lambda i: (i, 0, 0))
        dims = ("parallel",)
    else:
        # Long sequences: (row_tiles, batch) grid; PE tile resident across the inner batch
        # axis because its block index only depends on the row-tile index.
        tr = min(rows, rows_per_tile)
        tr = max(_SUBLANE, (tr // _SUBLANE) * _SUBLANE)
        if total_bytes >= _SMALL_PROBLEM_BYTES:
            want_tiles = pl.cdiv(4, b)
            if pl.cdiv(rows, tr) < want_tiles and rows >= want_tiles * _SUBLANE:
                tr = max(_SUBLANE, (rows // want_tiles) // _SUBLANE * _SUBLANE)
        grid = (pl.cdiv(rows, tr), b)

        pe_arg = pe_t
        kernel = _add_pe_rowtile_kernel
        in_specs = [
            pl.BlockSpec((pl.Squeezed(), tr, lanes), lambda j, i: (i, j, 0)),
            pl.BlockSpec((tr, lanes), lambda j, i: (j, 0)),
        ]
        out_spec = pl.BlockSpec((pl.Squeezed(), tr, lanes), lambda j, i: (i, j, 0))
        dims = ("parallel", "parallel")

    cost = pl.CostEstimate(
        flops=b * rows * lanes,
        transcendentals=0,
        bytes_accessed=(b * rows * lanes
                        * (word_embeddings.dtype.itemsize + jnp.dtype(out_dtype).itemsize)
                        + rows * lanes * pe_t.dtype.itemsize),
    )
    io_alias = ({0: 0} if (donate_input and jnp.dtype(out_dtype) == word_embeddings.dtype)
                else {})

    out = pl.pallas_call(
        kernel,
        out_shape=jax.ShapeDtypeStruct(xr.shape, out_dtype),
        grid_spec=pltpu.PrefetchScalarGridSpec(
            num_scalar_prefetch=0,
            grid=grid,
            in_specs=in_specs,
            out_specs=out_spec,
        ),
        compiler_params=pltpu.CompilerParams(
            dimension_semantics=dims,
            vmem_limit_bytes=_VMEM_LIMIT_BYTES,
        ),
        cost_estimate=cost,
        input_output_aliases=io_alias,
    )(xr, pe_arg)

    return out.reshape(b, seq_len, d)


class PositionEncoding:
    """JAX/Pallas equivalent of the PyTorch PositionEncoding module."""

    def __init__(self, d_model: int = 256, max_len: int = 1024):
        self.d_model = d_model
        self.max_len = max_len
        self.pe = make_position_encoding_table(d_model, max_len)     # f32 buffer, like torch
        # Pre-fold the table to lane-dense (rows, 128) once at setup so the hot path never
        # slices / casts / reshapes it per call.
        if d_model % _LANE != 0 and (max_len * d_model) % _LANE == 0:
            self.pe_lane = self.pe.reshape((max_len * d_model) // _LANE, _LANE)
        else:
            self.pe_lane = None

    def __call__(self, word_embeddings, *, donate_input: bool = False):
        return position_encoding_forward(word_embeddings, self.pe, self.pe_lane,
                                         donate_input=donate_input)


if __name__ == "__main__":
    # Small deterministic config consistent with the module's forward.
    d_model, max_len = 32, 64
    batch, seq_len = 2, 8

    penc = PositionEncoding(d_model=d_model, max_len=max_len)
    key = jax.random.PRNGKey(0)
    x3 = jax.random.normal(key, (batch, seq_len, d_model), dtype=jnp.float32)

    # 3-D path (small input -> batched-block kernel on the folded lane-dense view).
    out3 = jax.block_until_ready(penc(x3))
    ref3 = x3 + penc.pe[:seq_len, :d_model][None, :, :]
    assert out3.shape == ref3.shape and out3.dtype == ref3.dtype
    assert jnp.allclose(out3, ref3, atol=1e-6), "3-D path mismatch"

    # 2-D path.
    x2 = x3[0]
    out2 = jax.block_until_ready(penc(x2))
    ref2 = x2 + penc.pe[:seq_len, :d_model]
    assert jnp.allclose(out2, ref2, atol=1e-6), "2-D path mismatch"

    # bf16 embeddings promote to f32 like PyTorch (bf16 x + f32 PE buffer -> f32 out).
    xb = x3.astype(jnp.bfloat16)
    outb = jax.block_until_ready(penc(xb))
    refb = xb.astype(jnp.float32) + penc.pe[:seq_len, :d_model][None, :, :]
    assert outb.dtype == jnp.float32, "dtype promotion mismatch"
    assert jnp.allclose(outb, refb, atol=1e-6), "bf16 promotion path mismatch"

    # Larger lane-dense config (default d_model-style, D % 128 == 0) exercising the
    # row-tiled grid path with PE residency across the batch axis.
    penc_big = PositionEncoding(d_model=256, max_len=2048)
    xbig = jax.random.normal(jax.random.PRNGKey(0), (1, 2048, 256), dtype=jnp.float32)
    outbig = jax.block_until_ready(penc_big(xbig))
    refbig = xbig + penc_big.pe[:2048, :256][None, :, :]
    assert jnp.allclose(outbig, refbig, atol=1e-6), "row-tiled path mismatch"

    print("KERNEL_OK")
</pallas_src>

<mosaic_0001>
module attributes {stable_mosaic.version = 11 : i64} {
  func.func @_add_pe_batched_kernel(%arg0: i32, %arg1: memref<2x2x128xf32, #tpu.memory_space<vmem>>, %arg2: memref<16x128xf32, #tpu.memory_space<vmem>>, %arg3: memref<2x2x128xf32, #tpu.memory_space<vmem>>) attributes {dimension_semantics = [#tpu.dimension_semantics<parallel>], iteration_bounds = array<i64: 1>, scalar_prefetch = 0 : i64, scratch_operands = 0 : i64, tpu.core_type = #tpu.core_type<tc>, window_params = [{transform_indices = @transform_0, window_bounds = array<i64: 2, 2, 128>}, {pipeline_mode = #tpu.pipeline_mode<synchronous>, transform_indices = @transform_1, window_bounds = array<i64: 16, 128>}, {transform_indices = @transform_2, window_bounds = array<i64: 2, 2, 128>}]} {
    %c0 = arith.constant 0 : index
    %c0_0 = arith.constant 0 : index
    %0 = vector.load %arg2[%c0, %c0_0] : memref<16x128xf32, #tpu.memory_space<vmem>>, vector<2x128xf32>
    %c0_1 = arith.constant 0 : index
    %c0_2 = arith.constant 0 : index
    %c0_3 = arith.constant 0 : index
    %1 = vector.load %arg1[%c0_1, %c0_2, %c0_3] : memref<2x2x128xf32, #tpu.memory_space<vmem>>, vector<2x2x128xf32>
    %2 = vector.shape_cast %0 : vector<2x128xf32> to vector<1x2x128xf32>
    %3 = vector.broadcast %2 : vector<1x2x128xf32> to vector<2x2x128xf32>
    %4 = arith.addf %1, %3 : vector<2x2x128xf32>
    %c0_4 = arith.constant 0 : index
    %c0_5 = arith.constant 0 : index
    %c0_6 = arith.constant 0 : index
    %5 = vector.load %arg3[%c0_4, %c0_5, %c0_6] : memref<2x2x128xf32, #tpu.memory_space<vmem>>, vector<2x2x128xf32>
    tpu.vector_store %arg3[%c0_4, %c0_5, %c0_6], %4 {strides = array<i32>} : memref<2x2x128xf32, #tpu.memory_space<vmem>>, vector<2x2x128xf32>,
    return
  }
  func.func @transform_0(%arg0: i32) -> (i32, i32, i32) {
    %c0_i32 = arith.constant 0 : i32
    %c0_i32_0 = arith.constant 0 : i32
    %c0_i32_1 = arith.constant 0 : i32
    return %arg0, %c0_i32, %c0_i32_0 : i32, i32, i32
  }
  func.func @transform_1(%arg0: i32) -> (i32, i32) {
    %c0_i32 = arith.constant 0 : i32
    %c0_i32_0 = arith.constant 0 : i32
    %c0_i32_1 = arith.constant 0 : i32
    return %c0_i32, %c0_i32_0 : i32, i32
  }
  func.func @transform_2(%arg0: i32) -> (i32, i32, i32) {
    %c0_i32 = arith.constant 0 : i32
    %c0_i32_0 = arith.constant 0 : i32
    %c0_i32_1 = arith.constant 0 : i32
    return %arg0, %c0_i32, %c0_i32_0 : i32, i32, i32
  }
}

</mosaic_0001>

<llo_original>
// kernel: tpu_custom_call.1
$region0: #{tpu_custom_call.1}
  #allocation0 [shape = 'u32[]', space=smem, size = 0x4, offset = 0x4, fixed_abs, tag = 'smem constant byte address 0x4 - core index']
  #allocation1 [shape = 'u32[144,128]{1,0:T(1,128)}', space=vmem, size = 0x12000, scoped, tag = 'internal scratch']
  %s0 = inlined_call_operand.hbm [shape: f32[2,2,128], index: 0, kind: input, shape index: {}]
  %s1 = inlined_call_operand.hbm [shape: f32[16,128], index: 1, kind: input, shape index: {}]
  %s2 = inlined_call_operand.hbm [shape: f32[2,2,128], index: 2, kind: output, shape index: {}]
  %s3 = sld [smem:[#allocation0]]
  $region26: #{tpu_custom_call.1} parent=0
    _
  %s5 = ssub.s32 1, %s3
  %s6 = scalar_select 0, %s5, %s3
  $region1: #{tpu_custom_call.1} parent=0
    #allocation2 [shape = 'u8[2048]{0}', space=vmem, size = 0x800, scoped, tag = 'input window, operand 0, single buffered']
    #allocation3 [shape = 's32[1]{0}', space=sflag, size = 0x4, scoped, tag = 'scoped memory for tpu_custom_call.1']
    #allocation4 [shape = 's32[1]{0}', space=sflag, size = 0x4, scoped, tag = 'scoped memory for tpu_custom_call.1']
    #allocation5 [shape = 'u8[8192]{0}', space=vmem, size = 0x2000, scoped, tag = 'input window, operand 1, single buffered']
    #allocation6 [shape = 's32[1]{0}', space=sflag, size = 0x4, scoped, tag = 'scoped memory for tpu_custom_call.1']
    #allocation7 [shape = 'u8[2048]{0}', space=vmem, size = 0x800, scoped, tag = 'output window, operand 0, single buffered']
    %7 = vsyncpa [#allocation3], 0
    %8 = vsyncpa [#allocation6], 0
    %9 = vsyncpa [#allocation4], 0
    // Predicated region
    $region2: #{tpu_custom_call.1} parent=1 // pred_check
      _
    $region3: #{tpu_custom_call.1} parent=1 // pred_check_branch
      %11 = sbr.rel (0) target = $region5
    $region4: #{tpu_custom_call.1} parent=1 // pred_region
      %s13 = ssub.s32 64, 64
      %14 = vsyncadd [#allocation3], %s13
      %s15 = sshll.u32 [#allocation2], 4
      %s16 = int_to_ptr.vmem [resolvable:$true] %s15
      %21 = dma.hbm_to_vmem [thread:$0]  %s0, 64, %s16, [#allocation3], 32, 32, 2
    $region5: #{tpu_custom_call.1} parent=1 // pred_fallthru
      _
    // Predicated region
    $region6: #{tpu_custom_call.1} parent=1 // pred_check
      _
    $region7: #{tpu_custom_call.1} parent=1 // pred_check_branch
      %23 = sbr.rel (0) target = $region9
    $region8: #{tpu_custom_call.1} parent=1 // pred_region
      %s25 = ssub.s32 256, 256
      %26 = vsyncadd [#allocation6], %s25
      %s27 = sshll.u32 [#allocation5], 4
      %s28 = int_to_ptr.vmem [resolvable:$true] %s27
      %33 = dma.hbm_to_vmem [thread:$0]  %s1, 256, %s28, [#allocation6], 128, 128, 8
    $region9: #{tpu_custom_call.1} parent=1 // pred_fallthru
      _
    // Predicated region
    $region10: #{tpu_custom_call.1} parent=1 // pred_check
      _
    $region11: #{tpu_custom_call.1} parent=1 // pred_check_branch
      %35 = sbr.rel (0) target = $region13
    $region12: #{tpu_custom_call.1} parent=1 // pred_region
      %36 = dma.done [#allocation3], 64
    $region13: #{tpu_custom_call.1} parent=1 // pred_fallthru
      _
    // Predicated region
    $region14: #{tpu_custom_call.1} parent=1 // pred_check
      _
    $region15: #{tpu_custom_call.1} parent=1 // pred_check_branch
      %38 = sbr.rel (0) target = $region17
    $region16: #{tpu_custom_call.1} parent=1 // pred_region
      %39 = dma.done [#allocation6], 256
    $region17: #{tpu_custom_call.1} parent=1 // pred_fallthru
      _
    %v40 = vld [vmem:[#allocation5] sm:$0x3]
    %v41 = vld [vmem:[#allocation2] sm:$0x3]
    %v42 = vld [vmem:[#allocation2 + $0x2] sm:$0x3]
    %v43 = vadd.f32 %v41, %v40
    %v44 = vadd.f32 %v42, %v40
    %45 = vst [vmem:[#allocation7] sm:$0x3] %v43
    %46 = vst [vmem:[#allocation7 + $0x2] sm:$0x3] %v44
    // Predicated region
    $region18: #{tpu_custom_call.1} parent=1 // pred_check
      _
    $region19: #{tpu_custom_call.1} parent=1 // pred_check_branch
      %48 = sbr.rel (0) target = $region21
    $region20: #{tpu_custom_call.1} parent=1 // pred_region
      %s50 = ssub.s32 64, 64
      %51 = vsyncadd [#allocation4], %s50
      %s52 = sshll.u32 [#allocation7], 4
      %s53 = int_to_ptr.vmem [resolvable:$true] %s52
      %58 = dma.vmem_to_hbm [thread:$0]  %s53, 64, %s2, [#allocation4], 32, 32, 2
    $region21: #{tpu_custom_call.1} parent=1 // pred_fallthru
      _
    // Predicated region
    $region22: #{tpu_custom_call.1} parent=1 // pred_check
      _
    $region23: #{tpu_custom_call.1} parent=1 // pred_check_branch
      %60 = sbr.rel (0) target = $region25
    $region24: #{tpu_custom_call.1} parent=1 // pred_region
      %61 = dma.done [#allocation4], 64
    $region25: #{tpu_custom_call.1} parent=1 // pred_fallthru
      _
    %62 = vsyncpa [#allocation3], 1
    %63 = vsyncpa [#allocation6], 1
    %64 = vsyncpa [#allocation4], 1

</llo_original>
